<compile_context>
chip_gen: v7x
topology: tpu7x:2x2x1
jax: 0.10.0
libtpu: 0.0.40
codegen_flags: <defaults>
</compile_context>

<pallas_src>
import functools

import jax
import jax.numpy as jnp
from jax.experimental import pallas as pl
from jax.experimental.pallas import tpu as pltpu

_SUBLANE = 8    # f32 sublane packing
_LANE = 128     # lane width


def _round_up(x, m):
    return (x + m - 1) // m * m


def _conv1d_im2col_kernel(x_ref, w_ref, b_ref, o_ref, xcol_ref, *, k, L, n_valid):
    """im2col + single fused MXU matmul for Conv1d with "same" padding (odd k).

    x_ref:    (C_in_pad,  P)           lane-dense slab: x2d[ci, n*L + l] = src[n, ci, l]
    w_ref:    (C_out_pad, k*C_in_pad)  flattened weight (column index = t*C_in_pad + ci)
    b_ref:    (C_out_pad, 1)
    o_ref:    (C_out_pad, P)           lane-dense output slab
    xcol_ref: (k*C_in_pad, P)          im2col scratch (VMEM)
    """
    cp, P = x_ref.shape
    pad = k // 2
    x2d = x_ref[...]

    # Hoisted lane bookkeeping (one broadcast; JAX does not CSE broadcast_in_dim).
    lane = jax.lax.broadcasted_iota(jnp.int32, (cp, P), 1)
    pos = lane % L                 # position inside each length-L batch segment
    in_valid = lane < n_valid      # zero the lane-padding columns (deterministic output)

    # One full-width, tile-aligned store per tap.  No zero-init of xcol is needed:
    # every row block is fully written and the mask supplies the "same"-padding zeros.
    for t in range(k):             # static unroll over taps (k is tiny and odd)
        s = t - pad                # tap shift
        if s == 0:
            shifted = x2d
            mask = in_valid
        else:
            # shifted[:, c] == x2d[:, c + s]   (XLU lane rotation; jnp.roll semantics)
            shifted = pltpu.roll(x2d, (-s) % P, 1)
            if s > 0:
                mask = in_valid & (pos < L - s)
            else:
                mask = in_valid & (pos >= -s)
        xcol_ref[t * cp:(t + 1) * cp, :] = jnp.where(mask, shifted, 0.0)

    # One MXU matmul for the entire conv, f32 accumulation.
    acc = jnp.dot(w_ref[...], xcol_ref[...], preferred_element_type=jnp.float32)
    # Bias added once (single VPU broadcast-add), then one unmasked lane-dense store.
    o_ref[...] = (acc + b_ref[...]).astype(o_ref.dtype)


@functools.partial(jax.jit, static_argnames=("k",))
def convmodel_forward(src, weight, bias, *, k):
    """src: (N, C_in, L) f32; weight: (C_out, C_in, k); bias: (C_out,) -> (N, C_out, L)."""
    if k % 2 != 1:
        raise ValueError("Convmodel requires odd k (PyTorch module asserts k % 2 == 1).")
    N, c_in, L = src.shape
    c_out = weight.shape[0]
    assert weight.shape == (c_out, c_in, k)

    cp = _round_up(c_in, _SUBLANE)       # sublane-aligned im2col row blocks
    co_p = _round_up(c_out, _SUBLANE)    # sublane-aligned output rows
    n_valid = N * L
    P = _round_up(n_valid, _LANE)        # lane-dense (>=128 and a multiple of 128)

    # Tiny layout glue (element counts ~1e2): lane-dense input slab, zero-padded.
    x2d = jnp.zeros((cp, P), src.dtype)
    x2d = x2d.at[:c_in, :n_valid].set(src.transpose(1, 0, 2).reshape(c_in, n_valid))

    # Flatten weight so its columns match xcol's row ordering (t*C_in_pad + ci);
    # zero-pad the extra rows/columns (the MXU contraction over zeros is free).
    wflat = jnp.pad(weight.transpose(0, 2, 1),
                    ((0, co_p - c_out), (0, 0), (0, cp - c_in))).reshape(co_p, k * cp)
    b2d = jnp.pad(bias, (0, co_p - c_out)).reshape(co_p, 1)

    kernel = functools.partial(_conv1d_im2col_kernel, k=k, L=L, n_valid=n_valid)
    out_pad = pl.pallas_call(
        kernel,
        out_shape=jax.ShapeDtypeStruct((co_p, P), src.dtype),
        # No grid: the whole problem is resident in VMEM; a grid would only add
        # per-step overhead at this size.
        in_specs=[
            pl.BlockSpec(memory_space=pltpu.MemorySpace.VMEM),   # x2d
            pl.BlockSpec(memory_space=pltpu.MemorySpace.VMEM),   # flattened weight
            pl.BlockSpec(memory_space=pltpu.MemorySpace.VMEM),   # bias
        ],
        out_specs=pl.BlockSpec(memory_space=pltpu.MemorySpace.VMEM),
        scratch_shapes=[pltpu.VMEM((k * cp, P), jnp.float32)],
    )(x2d, wflat, b2d)

    # (C_out_pad, P) -> (N, C_out, L): pure layout plumbing outside the kernel.
    return out_pad[:c_out, :n_valid].reshape(c_out, N, L).transpose(1, 0, 2)


def _reference_conv1d(src, weight, bias, k):
    """Pure-JAX reference (matches PyTorch nn.Conv1d with padding=k//2)."""
    out = jax.lax.conv_general_dilated(
        src, weight,
        window_strides=(1,),
        padding=[(k // 2, k // 2)],
        dimension_numbers=("NCH", "OIH", "NCH"))
    return out + bias[None, :, None]


if __name__ == "__main__":
    # Small shapes consistent with the module: ninp=4, out=8, k=3, seq len=16, batch=2.
    N, C_IN, C_OUT, K, L = 2, 4, 8, 3, 16

    key = jax.random.PRNGKey(0)
    kx, kw, kb = jax.random.split(key, 3)

    src = jax.random.normal(kx, (N, C_IN, L), dtype=jnp.float32)

    # Params mirroring Convmodel.init_weights(): weight ~ U(-0.01, 0.01);
    # bias keeps Conv1d's default U(-1/sqrt(fan_in), 1/sqrt(fan_in)).
    initrange = 0.01
    weight = jax.random.uniform(kw, (C_OUT, C_IN, K), jnp.float32,
                                minval=-initrange, maxval=initrange)
    bound = 1.0 / (C_IN * K) ** 0.5
    bias = jax.random.uniform(kb, (C_OUT,), jnp.float32,
                              minval=-bound, maxval=bound)

    out = convmodel_forward(src, weight, bias, k=K)
    out = jax.block_until_ready(out)

    ref = _reference_conv1d(src, weight, bias, K)
    assert out.shape == (N, C_OUT, L), out.shape
    assert jnp.allclose(out, ref, atol=1e-5, rtol=1e-5), "mismatch vs reference"

    print("KERNEL_OK")
</pallas_src>

<mosaic_0001>
module attributes {stable_mosaic.version = 11 : i64} {
  func.func @_conv1d_im2col_kernel(%arg0: memref<8x128xf32, #tpu.memory_space<vmem>>, %arg1: memref<8x24xf32, #tpu.memory_space<vmem>>, %arg2: memref<8x1xf32, #tpu.memory_space<vmem>>, %arg3: memref<8x128xf32, #tpu.memory_space<vmem>>, %arg4: memref<24x128xf32, #tpu.memory_space<vmem>>) attributes {dimension_semantics = [], scalar_prefetch = 0 : i64, scratch_operands = 1 : i64, tpu.core_type = #tpu.core_type<tc>} {
    %c0 = arith.constant 0 : index
    %c0_0 = arith.constant 0 : index
    %0 = vector.load %arg0[%c0, %c0_0] : memref<8x128xf32, #tpu.memory_space<vmem>>, vector<8x128xf32>
    %1 = tpu.iota {dimensions = array<i32: 1>} : vector<8x128xi32>
    %c16_i32 = arith.constant 16 : i32
    %c0_i32 = arith.constant 0 : i32
    %2 = arith.cmpi eq, %c16_i32, %c0_i32 : i32
    %c1_i32 = arith.constant 1 : i32
    %3 = arith.select %2, %c1_i32, %c16_i32 : i32
    %4 = vector.broadcast %3 : i32 to vector<8x128xi32>
    %5 = arith.remsi %1, %4 : vector<8x128xi32>
    %c0_i32_1 = arith.constant 0 : i32
    %6 = vector.broadcast %c0_i32_1 : i32 to vector<8x128xi32>
    %7 = arith.cmpi ne, %5, %6 : vector<8x128xi32>
    %c0_i32_2 = arith.constant 0 : i32
    %8 = vector.broadcast %c0_i32_2 : i32 to vector<8x128xi32>
    %9 = arith.cmpi slt, %5, %8 : vector<8x128xi32>
    %c0_i32_3 = arith.constant 0 : i32
    %10 = arith.cmpi slt, %3, %c0_i32_3 : i32
    %11 = vector.broadcast %10 : i1 to vector<8x128xi1>
    %12 = vector.broadcast %11 : vector<8x128xi1> to vector<8x128xi1>
    %13 = arith.xori %9, %12 : vector<8x128xi1>
    %14 = arith.andi %13, %7 : vector<8x128xi1>
    %15 = vector.broadcast %3 : i32 to vector<8x128xi32>
    %16 = arith.addi %5, %15 : vector<8x128xi32>
    %17 = arith.select %14, %16, %5 : vector<8x128xi1>, vector<8x128xi32>
    %c32_i32 = arith.constant 32 : i32
    %18 = vector.broadcast %c32_i32 : i32 to vector<8x128xi32>
    %19 = arith.cmpi slt, %1, %18 : vector<8x128xi32>
    %c1_i32_4 = arith.constant 1 : i32
    %20 = tpu.dynamic_rotate %0 by %c1_i32_4 dim 1 : vector<8x128xf32>, i32 -> vector<8x128xf32>
    %c1_i32_5 = arith.constant 1 : i32
    %21 = vector.broadcast %c1_i32_5 : i32 to vector<8x128xi32>
    %22 = arith.cmpi sge, %17, %21 : vector<8x128xi32>
    %23 = arith.andi %19, %22 : vector<8x128xi1>
    %cst = arith.constant 0.000000e+00 : f32
    %24 = vector.broadcast %cst : f32 to vector<8x128xf32>
    %25 = arith.select %23, %20, %24 : vector<8x128xi1>, vector<8x128xf32>
    %c0_6 = arith.constant 0 : index
    %c0_7 = arith.constant 0 : index
    %26 = vector.load %arg4[%c0_6, %c0_7] : memref<24x128xf32, #tpu.memory_space<vmem>>, vector<8x128xf32>
    tpu.vector_store %arg4[%c0_6, %c0_7], %25 {strides = array<i32>} : memref<24x128xf32, #tpu.memory_space<vmem>>, vector<8x128xf32>,
    %cst_8 = arith.constant 0.000000e+00 : f32
    %27 = vector.broadcast %cst_8 : f32 to vector<8x128xf32>
    %28 = arith.select %19, %0, %27 : vector<8x128xi1>, vector<8x128xf32>
    %c8 = arith.constant 8 : index
    %c0_9 = arith.constant 0 : index
    %29 = vector.load %arg4[%c8, %c0_9] : memref<24x128xf32, #tpu.memory_space<vmem>>, vector<8x128xf32>
    tpu.vector_store %arg4[%c8, %c0_9], %28 {strides = array<i32>} : memref<24x128xf32, #tpu.memory_space<vmem>>, vector<8x128xf32>,
    %c127_i32 = arith.constant 127 : i32
    %30 = tpu.dynamic_rotate %0 by %c127_i32 dim 1 : vector<8x128xf32>, i32 -> vector<8x128xf32>
    %c15_i32 = arith.constant 15 : i32
    %31 = vector.broadcast %c15_i32 : i32 to vector<8x128xi32>
    %32 = arith.cmpi slt, %17, %31 : vector<8x128xi32>
    %33 = arith.andi %19, %32 : vector<8x128xi1>
    %cst_10 = arith.constant 0.000000e+00 : f32
    %34 = vector.broadcast %cst_10 : f32 to vector<8x128xf32>
    %35 = arith.select %33, %30, %34 : vector<8x128xi1>, vector<8x128xf32>
    %c16 = arith.constant 16 : index
    %c0_11 = arith.constant 0 : index
    %36 = vector.load %arg4[%c16, %c0_11] : memref<24x128xf32, #tpu.memory_space<vmem>>, vector<8x128xf32>
    tpu.vector_store %arg4[%c16, %c0_11], %35 {strides = array<i32>} : memref<24x128xf32, #tpu.memory_space<vmem>>, vector<8x128xf32>,
    %c0_12 = arith.constant 0 : index
    %c0_13 = arith.constant 0 : index
    %37 = vector.load %arg1[%c0_12, %c0_13] : memref<8x24xf32, #tpu.memory_space<vmem>>, vector<8x24xf32>
    %c0_14 = arith.constant 0 : index
    %c0_15 = arith.constant 0 : index
    %38 = vector.load %arg4[%c0_14, %c0_15] : memref<24x128xf32, #tpu.memory_space<vmem>>, vector<24x128xf32>
    %cst_16 = arith.constant dense<0.000000e+00> : vector<8x128xf32>
    %39 = tpu.matmul %37, %38, %cst_16 {dimension_numbers = #tpu.dot_dimension_numbers<[1], [0], [0], [1], [0, 0, 1, 1], [], []>} : vector<8x24xf32>, vector<24x128xf32>, vector<8x128xf32> -> vector<8x128xf32>
    %c0_17 = arith.constant 0 : index
    %c0_18 = arith.constant 0 : index
    %40 = vector.load %arg2[%c0_17, %c0_18] : memref<8x1xf32, #tpu.memory_space<vmem>>, vector<8x1xf32>
    %41 = vector.broadcast %40 : vector<8x1xf32> to vector<8x128xf32>
    %42 = arith.addf %39, %41 : vector<8x128xf32>
    %c0_19 = arith.constant 0 : index
    %c0_20 = arith.constant 0 : index
    %43 = vector.load %arg3[%c0_19, %c0_20] : memref<8x128xf32, #tpu.memory_space<vmem>>, vector<8x128xf32>
    tpu.vector_store %arg3[%c0_19, %c0_20], %42 {strides = array<i32>} : memref<8x128xf32, #tpu.memory_space<vmem>>, vector<8x128xf32>,
    return
  }
}

</mosaic_0001>

<llo_original>
// kernel: convmodel_forward.1
$region0: #{convmodel_forward.1}
  #allocation0 [shape = 'u32[]', space=smem, size = 0x4, offset = 0x4, fixed_abs, tag = 'smem constant byte address 0x4 - core index']
  #allocation1 [shape = 'u32[144,128]{1,0:T(1,128)}', space=vmem, size = 0x12000, scoped, tag = 'internal scratch']
  #allocation2 [shape = 'f32[24,128]{1,0:T(8,128)}', space=vmem, size = 0x3000, scoped, tag = 'scratch operand']
  %s0 = inlined_call_operand.vmem [shape: f32[8,128], index: 0, kind: input, shape index: {}]
  %s1 = inlined_call_operand.vmem [shape: f32[8,24], index: 1, kind: input, shape index: {}]
  %s2 = inlined_call_operand.vmem [shape: f32[8,1], index: 2, kind: input, shape index: {}]
  %s3 = inlined_call_operand.vmem [shape: f32[8,128], index: 3, kind: output, shape index: {}]
  %s4 = sld [smem:[#allocation0]]
  $region22: #{convmodel_forward.1} parent=0
    _
  %s6 = ssub.s32 1, %s4
  %s7 = scalar_select 0, %s6, %s4
  // Predicated region
  $region2: #{convmodel_forward.1} parent=0 // pred_check
    _
  $region3: #{convmodel_forward.1} parent=0 // pred_check_branch
    %9 = sbr.rel (0) target = $region5
  $region4: #{convmodel_forward.1} parent=0 // pred_region
    _
  $region5: #{convmodel_forward.1} parent=0 // pred_fallthru
    _
  // Predicated region
  $region6: #{convmodel_forward.1} parent=0 // pred_check
    _
  $region7: #{convmodel_forward.1} parent=0 // pred_check_branch
    %11 = sbr.rel (0) target = $region9
  $region8: #{convmodel_forward.1} parent=0 // pred_region
    _
  $region9: #{convmodel_forward.1} parent=0 // pred_fallthru
    _
  // Predicated region
  $region10: #{convmodel_forward.1} parent=0 // pred_check
    _
  $region11: #{convmodel_forward.1} parent=0 // pred_check_branch
    %13 = sbr.rel (0) target = $region13
  $region12: #{convmodel_forward.1} parent=0 // pred_region
    _
  $region13: #{convmodel_forward.1} parent=0 // pred_fallthru
    _
  %v14 = vld [vmem:[%s0] sm:$0xff]
  %v15 = vlaneseq
  %v16 = vand.u32 %v15, 127
  %vm17 = vcmp.lt.s32.totalorder %v16, 0
  %v18 = vsub.s32 0, %v16
  %v19 = vsel %vm17, %v18, %v16
  %v20 = vshrl.u32 %v19, 4
  %v21 = vand.u32 %v19, 15
  %v22 = vsub.s32 0, %v21
  %v23 = vsel %vm17, %v22, %v21
  %vm24 = vcmp.ne.s32.totalorder %v23, 0
  %vm25 = vcmp.lt.s32.totalorder %v23, 0
  %vm26 = vmand %vm25, %vm24
  %v27 = vadd.s32 %v23, 16
  %v28 = vsel %vm26, %v27, %v23
  %vm29 = vcmp.lt.s32.totalorder %v16, 32
  %30 = vrot.lane.b32.xlu0 %v14, 1
  %v31 = vpop.permute.xlu0 %30
  %vm32 = vcmp.ge.s32.totalorder %v28, 1
  %vm33 = vmand %vm29, %vm32
  %v34 = vsel %vm33, %v31, 0.0
  %35 = vst [vmem:[#allocation2] sm:$0xff] %v34
  %v36 = vsel %vm29, %v14, 0.0
  %37 = vst [vmem:[#allocation2 + $0x8] sm:$0xff] %v36
  %38 = vrot.lane.b32.xlu0 %v14, 127
  %v39 = vpop.permute.xlu0 %38
  %vm40 = vcmp.lt.s32.totalorder %v28, 15
  %vm41 = vmand %vm29, %vm40
  %v42 = vsel %vm41, %v39, 0.0
  %43 = vst [vmem:[#allocation2 + $0x10] sm:$0xff] %v42
  %v44 = vld [vmem:[%s1] sm:$0xff]
  %v45 = vld [vmem:[#allocation2] sm:$0xff]
  %v46 = vld [vmem:[#allocation2 + $0x8] sm:$0xff]
  %v47 = vld [vmem:[#allocation2 + $0x10] sm:$0xff]
  %v48 = vld [vmem:[%s2] sm:$0xff]
  %50 = vset.pattern.permute.xlu0 0
  %51 = vperm.xlu0 %50, %v48
  %v52 = vpop.permute.xlu0 %51
  %vm54 = vcmask 195584
  %v56 = vsel %vm54, %v44, 0
  %58 = vmatprep.subr.mxu0 0.0
  %59 = vmatpush1.msra.mxu0 %v45
  %60 = vmatprep.subr.mxu0 0.0
  %61 = vmatpush1.msra.mxu0 %v46
  %62 = vmatprep.subr.mxu0 0.0
  %63 = vmatpush1.msra.mxu0 %v47
  %64 = vmatprep.subr.mxu0 0.0
  %65 = vmatpush1.msra.mxu0 0.0
  %66 = vmatprep.subr.mxu0 0.0
  %67 = vmatpush1.msra.mxu0 0.0
  %68 = vmatprep.subr.mxu0 0.0
  %69 = vmatpush1.msra.mxu0 0.0
  %70 = vmatprep.subr.mxu0 0.0
  %71 = vmatpush1.msra.mxu0 0.0
  %72 = vmatprep.subr.mxu0 0.0
  %73 = vmatpush1.msra.mxu0 0.0
  %74 = vmatprep.subr.mxu0 0.0
  %75 = vmatpush1.msra.mxu0 0.0
  %76 = vmatprep.subr.mxu0 0.0
  %77 = vmatpush1.msra.mxu0 0.0
  %78 = vmatprep.subr.mxu0 0.0
  %79 = vmatpush1.msra.mxu0 0.0
  %80 = vmatprep.subr.mxu0 0.0
  %81 = vmatpush1.msra.mxu0 0.0
  %82 = vmatprep.subr.mxu0 0.0
  %83 = vmatpush1.msra.mxu0 0.0
  %84 = vmatprep.subr.mxu0 0.0
  %85 = vmatpush1.msra.mxu0 0.0
  %86 = vmatprep.subr.mxu0 0.0
  %87 = vmatpush1.msra.mxu0 0.0
  %88 = vmatprep.subr.mxu0 0.0
  %89 = vmatpush1.msra.mxu0 0.0
  %90 = vmatprep.subr.mxu0 0.0
  %91 = vmatpush1.msra.mxu0 0.0
  %92 = vmatprep.subr.mxu0 0.0
  %93 = vmatpush1.msra.mxu0 0.0
  %94 = vmatprep.subr.mxu0 0.0
  %95 = vmatpush1.msra.mxu0 0.0
  %96 = vmatprep.subr.mxu0 0.0
  %97 = vmatpush1.msra.mxu0 0.0
  %98 = vmatprep.subr.mxu0 0.0
  %99 = vmatpush1.msra.mxu0 0.0
  %100 = vmatprep.subr.mxu0 0.0
  %101 = vmatpush1.msra.mxu0 0.0
  %102 = vmatprep.subr.mxu0 0.0
  %103 = vmatpush1.msra.mxu0 0.0
  %104 = vmatprep.subr.mxu0 0.0
  %105 = vmatpush1.msra.mxu0 0.0
  %106 = vmatprep.subr.mxu0 0.0
  %107 = vmatpush1.msra.mxu0 0.0
  %108 = vmatprep.subr.mxu0 0.0
  %109 = vmatpush1.msra.mxu0 0.0
  %110 = vmatprep.subr.mxu0 0.0
  %111 = vmatpush1.msra.mxu0 0.0
  %112 = vmatprep.subr.mxu0 0.0
  %113 = vmatpush1.msra.mxu0 0.0
  %114 = vmatprep.subr.mxu0 0.0
  %115 = vmatpush1.msra.mxu0 0.0
  %116 = vmatprep.subr.mxu0 0.0
  %117 = vmatpush1.msra.mxu0 0.0
  %118 = vmatprep.subr.mxu0 0.0
  %119 = vmatpush1.msra.mxu0 0.0
  %120 = vmatprep.subr.mxu0 0.0
  %121 = vmatpush1.msra.mxu0 0.0
  %122 = vmatprep.mubr.f32.mxu0 0.0
  %123 = vmatmul.mubr.f32.gmra.mrb[0].mxu0 %v56
  %v124 = vpop.f32.mrb[0].mxu0
  %v125 = vadd.f32 %v52, %v124
  %v126 = vpop.f32.mrb[0].mxu0
  %127 = vdwg.mxu0
  %128 = vst [vmem:[%s3] sm:$0xff] %v125
  // Predicated region
  $region14: #{convmodel_forward.1} parent=0 // pred_check
    _
  $region15: #{convmodel_forward.1} parent=0 // pred_check_branch
    %130 = sbr.rel (0) target = $region17
  $region16: #{convmodel_forward.1} parent=0 // pred_region
    _
  $region17: #{convmodel_forward.1} parent=0 // pred_fallthru
    _
  // Predicated region
  $region18: #{convmodel_forward.1} parent=0 // pred_check
    _
  $region19: #{convmodel_forward.1} parent=0 // pred_check_branch
    %132 = sbr.rel (0) target = $region21
  $region20: #{convmodel_forward.1} parent=0 // pred_region
    _
  $region21: #{convmodel_forward.1} parent=0 // pred_fallthru
    _

</llo_original>
